<compile_context>
chip_gen: v7x
topology: tpu7x:2x2x1
jax: 0.10.0
libtpu: 0.0.40
codegen_flags: <defaults>
</compile_context>

<pallas_src>
import math

import jax
import jax.numpy as jnp
from jax.experimental import pallas as pl
from jax.experimental.pallas import tpu as pltpu


def _make_dma_copy_kernel(row_chunks):
    """Build a kernel that copies `row_chunks` (static (start, size) pairs along
    the leading dim) from the HBM input ref to the HBM output ref via DMA."""

    def kernel(x_hbm, o_hbm, sem):
        # Issue every chunk's DMA first, then wait on all of them, so the DMA
        # engines can move the chunks concurrently.
        copies = []
        for i, (start, size) in enumerate(row_chunks):
            cp = pltpu.make_async_copy(
                x_hbm.at[pl.ds(start, size)],
                o_hbm.at[pl.ds(start, size)],
                sem.at[i],
            )
            cp.start()
            copies.append(cp)
        for cp in copies:
            cp.wait()

    return kernel


def flatten(x, *, max_chunks=4):
    """Pallas equivalent of torch Flatten: (B, ...) -> (B, prod(rest))."""
    b = x.shape[0]
    flat = math.prod(x.shape[1:])

    # This reshape *is* the flatten (row-major order == torch .view(B, -1)).
    # XLA handles it with zero or one HBM pass; everything below just moves the
    # already-flat bytes once, HBM->HBM, as the Pallas stand-in for a
    # fusion/copy target.  For a truly standalone Flatten, returning `x2`
    # directly would be the optimal implementation.
    x2 = x.reshape(b, flat)

    # Static chunking along the leading (batch) dim only -> no (8,128) tiling
    # constraints, valid for any dtype and any `flat`.
    n_chunks = max(1, min(b, max_chunks))
    rows_per = -(-b // n_chunks)  # ceil div
    row_chunks = []
    r = 0
    while r < b:
        row_chunks.append((r, min(rows_per, b - r)))
        r += rows_per
    n_chunks = len(row_chunks)

    nbytes = b * flat * x.dtype.itemsize

    out = pl.pallas_call(
        _make_dma_copy_kernel(row_chunks),
        out_shape=jax.ShapeDtypeStruct((b, flat), x.dtype),
        in_specs=[pl.BlockSpec(memory_space=pl.ANY)],
        out_specs=pl.BlockSpec(memory_space=pl.ANY),
        scratch_shapes=[pltpu.SemaphoreType.DMA((n_chunks,))],
        cost_estimate=pl.CostEstimate(
            flops=0, transcendentals=0, bytes_accessed=2 * nbytes
        ),
    )(x2)
    return out


if __name__ == "__main__":
    key = jax.random.PRNGKey(0)
    x = jax.random.normal(key, (2, 4, 16, 16), dtype=jnp.float32)

    out = flatten(x)
    jax.block_until_ready(out)

    # Reference: plain JAX row-major reshape == torch x.view(B, -1).
    ref = x.reshape(x.shape[0], -1)
    assert out.shape == (2, 4 * 16 * 16)
    assert out.dtype == x.dtype
    assert jnp.array_equal(out, ref)

    print("KERNEL_OK")
</pallas_src>

<mosaic_0001>
module attributes {stable_mosaic.version = 11 : i64} {
  func.func @kernel(%arg0: memref<2x1024xf32, #tpu.memory_space<any>>, %arg1: memref<2x1024xf32, #tpu.memory_space<any>>, %arg2: memref<2x!tpu.dma_semaphore, #tpu.memory_space<semaphore_mem>>) attributes {dimension_semantics = [], scalar_prefetch = 0 : i64, scratch_operands = 1 : i64, tpu.core_type = #tpu.core_type<tc>} {
    %c0_i32 = arith.constant 0 : i32
    %c0_i32_0 = arith.constant 0 : i32
    %c0_i32_1 = arith.constant 0 : i32
    %0 = tpu.memref_slice %arg0[%c0_i32_0, %c0_i32_1] : memref<2x1024xf32, #tpu.memory_space<any>> -> memref<1x1024xf32, #tpu.memory_space<any>>
    %c0_i32_2 = arith.constant 0 : i32
    %c0_i32_3 = arith.constant 0 : i32
    %1 = tpu.memref_slice %arg1[%c0_i32_2, %c0_i32_3] : memref<2x1024xf32, #tpu.memory_space<any>> -> memref<1x1024xf32, #tpu.memory_space<any>>
    %2 = tpu.memref_slice %arg2[%c0_i32] : memref<2x!tpu.dma_semaphore, #tpu.memory_space<semaphore_mem>> -> memref<1x!tpu.dma_semaphore, #tpu.memory_space<semaphore_mem>>
    %3 = tpu.memref_squeeze %2 : memref<1x!tpu.dma_semaphore, #tpu.memory_space<semaphore_mem>> -> memref<!tpu.dma_semaphore, #tpu.memory_space<semaphore_mem>>
    tpu.enqueue_dma source(%0 : memref<1x1024xf32, #tpu.memory_space<any>>) target(%1 : memref<1x1024xf32, #tpu.memory_space<any>>) target_semaphore(%3 : memref<!tpu.dma_semaphore, #tpu.memory_space<semaphore_mem>>)
    %c1_i32 = arith.constant 1 : i32
    %c1_i32_4 = arith.constant 1 : i32
    %c0_i32_5 = arith.constant 0 : i32
    %4 = tpu.memref_slice %arg0[%c1_i32_4, %c0_i32_5] : memref<2x1024xf32, #tpu.memory_space<any>> -> memref<1x1024xf32, #tpu.memory_space<any>>
    %c1_i32_6 = arith.constant 1 : i32
    %c0_i32_7 = arith.constant 0 : i32
    %5 = tpu.memref_slice %arg1[%c1_i32_6, %c0_i32_7] : memref<2x1024xf32, #tpu.memory_space<any>> -> memref<1x1024xf32, #tpu.memory_space<any>>
    %6 = tpu.memref_slice %arg2[%c1_i32] : memref<2x!tpu.dma_semaphore, #tpu.memory_space<semaphore_mem>> -> memref<1x!tpu.dma_semaphore, #tpu.memory_space<semaphore_mem>>
    %7 = tpu.memref_squeeze %6 : memref<1x!tpu.dma_semaphore, #tpu.memory_space<semaphore_mem>> -> memref<!tpu.dma_semaphore, #tpu.memory_space<semaphore_mem>>
    tpu.enqueue_dma source(%4 : memref<1x1024xf32, #tpu.memory_space<any>>) target(%5 : memref<1x1024xf32, #tpu.memory_space<any>>) target_semaphore(%7 : memref<!tpu.dma_semaphore, #tpu.memory_space<semaphore_mem>>)
    %c0_i32_8 = arith.constant 0 : i32
    %c0_i32_9 = arith.constant 0 : i32
    %c0_i32_10 = arith.constant 0 : i32
    %8 = tpu.memref_slice %arg0[%c0_i32_9, %c0_i32_10] : memref<2x1024xf32, #tpu.memory_space<any>> -> memref<1x1024xf32, #tpu.memory_space<any>>
    %c0_i32_11 = arith.constant 0 : i32
    %c0_i32_12 = arith.constant 0 : i32
    %9 = tpu.memref_slice %arg1[%c0_i32_11, %c0_i32_12] : memref<2x1024xf32, #tpu.memory_space<any>> -> memref<1x1024xf32, #tpu.memory_space<any>>
    %10 = tpu.memref_slice %arg2[%c0_i32_8] : memref<2x!tpu.dma_semaphore, #tpu.memory_space<semaphore_mem>> -> memref<1x!tpu.dma_semaphore, #tpu.memory_space<semaphore_mem>>
    %11 = tpu.memref_squeeze %10 : memref<1x!tpu.dma_semaphore, #tpu.memory_space<semaphore_mem>> -> memref<!tpu.dma_semaphore, #tpu.memory_space<semaphore_mem>>
    tpu.wait_dma2 semaphore(%11 : memref<!tpu.dma_semaphore, #tpu.memory_space<semaphore_mem>>) src(%8 : memref<1x1024xf32, #tpu.memory_space<any>>) dst(%9 : memref<1x1024xf32, #tpu.memory_space<any>>)
    %c1_i32_13 = arith.constant 1 : i32
    %c1_i32_14 = arith.constant 1 : i32
    %c0_i32_15 = arith.constant 0 : i32
    %12 = tpu.memref_slice %arg0[%c1_i32_14, %c0_i32_15] : memref<2x1024xf32, #tpu.memory_space<any>> -> memref<1x1024xf32, #tpu.memory_space<any>>
    %c1_i32_16 = arith.constant 1 : i32
    %c0_i32_17 = arith.constant 0 : i32
    %13 = tpu.memref_slice %arg1[%c1_i32_16, %c0_i32_17] : memref<2x1024xf32, #tpu.memory_space<any>> -> memref<1x1024xf32, #tpu.memory_space<any>>
    %14 = tpu.memref_slice %arg2[%c1_i32_13] : memref<2x!tpu.dma_semaphore, #tpu.memory_space<semaphore_mem>> -> memref<1x!tpu.dma_semaphore, #tpu.memory_space<semaphore_mem>>
    %15 = tpu.memref_squeeze %14 : memref<1x!tpu.dma_semaphore, #tpu.memory_space<semaphore_mem>> -> memref<!tpu.dma_semaphore, #tpu.memory_space<semaphore_mem>>
    tpu.wait_dma2 semaphore(%15 : memref<!tpu.dma_semaphore, #tpu.memory_space<semaphore_mem>>) src(%12 : memref<1x1024xf32, #tpu.memory_space<any>>) dst(%13 : memref<1x1024xf32, #tpu.memory_space<any>>)
    return
  }
}

</mosaic_0001>

<llo_original>
// kernel: tpu_custom_call.1
$region0: #{tpu_custom_call.1}
  #allocation0 [shape = 'u32[]', space=smem, size = 0x4, offset = 0x4, fixed_abs, tag = 'smem constant byte address 0x4 - core index']
  #allocation1 [shape = 'u32[144,128]{1,0:T(1,128)}', space=vmem, size = 0x12000, scoped, tag = 'internal scratch']
  #allocation2 [shape = 's32[2]{0}', space=sflag, size = 0x8, scoped, tag = 'scratch operand']
  #allocation3 [shape = 's32[]', space=sflag, size = 0x4, offset = 0, fixed_abs, tag = 'sflag constant byte address 0x0 - dummy sync flag']
  #allocation5 [shape = 's32[]', space=sflag, size = 0x4, offset = 0, fixed_abs, tag = 'sflag constant byte address 0x0 - dummy sync flag']
  %s0 = inlined_call_operand.hbm [shape: f32[2,1024], index: 0, kind: input, shape index: {}]
  %s1 = inlined_call_operand.hbm [shape: f32[2,1024], index: 1, kind: output, shape index: {}]
  %s2 = sld [smem:[#allocation0]]
  $region2: #{tpu_custom_call.1} parent=0
    _
  %s4 = ssub.s32 1, %s2
  %s5 = scalar_select 0, %s4, %s2
  $region1: #{tpu_custom_call.1} parent=0
    #allocation4 [shape = 'u32[3]{0}', space=smem, size = 0xc, scoped, tag = 'DMA stride descriptor']
    #allocation6 [shape = 'u32[3]{0}', space=smem, size = 0xc, scoped, tag = 'DMA stride descriptor']
    %s7 = sshll.u32 1, 14
    %s8 = sxor.u32 4294967295, %s7
    %s11 = sshll.u32 3, 24
    %s12 = sxor.u32 4294967295, %s11
    %s13 = sand.u32 0, %s12
    %s15 = sor.u32 %s13, 0
    %18 = sst [smem:[#allocation4]] 32
    %s19 = scalar_lea.smem [#allocation4], 1
    %20 = sst [smem:[%s19]] 32
    %s21 = scalar_lea.smem [#allocation4], 2
    %22 = sst [smem:[%s21]] 1
    %24 = dma.general %s0, 128, %s1, [#allocation2], [#allocation3], [#allocation4], %s15, 0
    %s25 = scalar_lea.hbm %s0, 16
    %s26 = scalar_lea.hbm %s1, 16
    %s27 = scalar_lea.sflag [#allocation2], 1
    %s29 = sshll.u32 1, 14
    %s30 = sxor.u32 4294967295, %s29
    %s33 = sshll.u32 3, 24
    %s34 = sxor.u32 4294967295, %s33
    %s35 = sand.u32 0, %s34
    %s37 = sor.u32 %s35, 0
    %40 = sst [smem:[#allocation6]] 32
    %s41 = scalar_lea.smem [#allocation6], 1
    %42 = sst [smem:[%s41]] 32
    %s43 = scalar_lea.smem [#allocation6], 2
    %44 = sst [smem:[%s43]] 1
    %46 = dma.general %s25, 128, %s26, %s27, [#allocation5], [#allocation6], %s37, 0
    %s47 = smul.u32 1, 8
    %s48 = sshll.u32 %s47, 4
    %49 = dma.done [#allocation2], %s48
    %s50 = sshll.u32 %s47, 4
    %51 = dma.done %s27, %s50
  %52 = vsyncmov [#allocation2]
  %s53 = vpop.sfrf %52
  %p54 = scmp.eq.s32.totalorder %s53, 0
  %p55 = pneg %p54
  %57 = shalt.err (%p55)
  %s58 = scalar_lea.sflag [#allocation2], 1
  %59 = vsyncmov %s58
  %s60 = vpop.sfrf %59
  %p61 = scmp.eq.s32.totalorder %s60, 0
  %p62 = pneg %p61
  %64 = shalt.err (%p62)

</llo_original>
